<compile_context>
chip_gen: v6e
topology: v6e:2x2x1
jax: 0.10.0
libtpu: 0.0.40
codegen_flags: <defaults>
</compile_context>

<pallas_src>
import jax
import jax.numpy as jnp
from jax.experimental import pallas as pl
from jax.experimental.pallas import tpu as pltpu


def _cts_step_kernel(xT_ref, uT_ref, w1x_ref, w1u_ref, b1_ref, w2_ref, b2_ref,
                     dxT_ref):
    n_x = xT_ref.shape[0]
    n_u = uT_ref.shape[0]

    xt = xT_ref[...].astype(jnp.float32)      # (n_x, tm)   batch on lanes
    ut = uT_ref[...].astype(jnp.float32)      # (n_u, tm)
    w1x = w1x_ref[...].astype(jnp.float32)    # (hidden, n_x)
    w1u = w1u_ref[...].astype(jnp.float32)    # (hidden, n_u)

    # ---- Layer 1: VPU outer-product accumulation over the tiny feature axis.
    # K = n_x + n_u (= 3) would starve the MXU; n_x+n_u broadcast-FMAs instead.
    acc = b1_ref[...].astype(jnp.float32)                 # (hidden, 1)
    for k in range(n_x):
        acc = acc + w1x[:, k:k + 1] * xt[k:k + 1, :]       # (hidden,1)*(1,tm)
    for k in range(n_u):
        acc = acc + w1u[:, k:k + 1] * ut[k:k + 1, :]
    h = jnp.maximum(acc, 0.0)                              # ReLU (VPU), (hidden, tm)

    # ---- Layer 2: dx^T = W2 @ h. K = hidden -> MXU; output is lane-dense.
    dxt = jnp.dot(w2_ref[...].astype(jnp.float32), h,
                  preferred_element_type=jnp.float32)      # (n_x, tm)
    dxT_ref[...] = (dxt + b2_ref[...]).astype(dxT_ref.dtype)


def cts_neural_state_space(x, u, w1, b1, w2, b2, *, block_b=16384,
                           vmem_limit_bytes=32 * 1024 * 1024):
    """Fused forward of CTSNeuralStateSpace.

    x:  (B, n_x)            u:  (B, n_u)
    w1: (hidden, n_x+n_u)   b1: (hidden,)   -- net[0] (PyTorch (out, in) layout)
    w2: (n_x, hidden)       b2: (n_x,)      -- net[2]
    returns dx: (B, n_x)
    """
    B, n_x = x.shape
    Bu, n_u = u.shape
    assert Bu == B
    hidden, n_in = w1.shape
    assert n_in == n_x + n_u
    assert w2.shape == (n_x, hidden)
    assert b1.shape == (hidden,) and b2.shape == (n_x,)

    # One-time wrapper-side layout prep: batch on the lane axis (x^T/u^T in,
    # dx^T out), W1 pre-split into its x / u column blocks, biases as (C, 1)
    # columns so the kernel adds them with a plain lane-broadcast.
    x_t = x.T                      # (n_x, B)
    u_t = u.T                      # (n_u, B)
    w1x = w1[:, :n_x]              # (hidden, n_x)
    w1u = w1[:, n_x:]              # (hidden, n_u)
    b1_col = b1.reshape(hidden, 1)
    b2_col = b2.reshape(n_x, 1)

    # Batch tiling: block == full array for small B (always legal); otherwise
    # lane-aligned (multiple-of-128) tiles, with at least two blocks so the
    # "parallel" axis can shard across TensorCores (v7x has 2 per chip).
    # block_b bounds VMEM use (live hidden activation is tm * hidden * 4 B).
    if B <= 256:
        tm = B
    else:
        tm = min(block_b, 128 * pl.cdiv(B, 2 * 128))
    grid = (pl.cdiv(B, tm),)

    itemsize = jnp.dtype(x.dtype).itemsize
    flops = 2 * B * n_in * hidden + 2 * B * hidden * n_x
    bytes_accessed = itemsize * (
        B * (n_in + n_x)            # x, u, dx
        + hidden * (n_in + 1)       # W1, b1
        + n_x * (hidden + 1)        # W2, b2
    )
    cost = pl.CostEstimate(flops=flops, transcendentals=0,
                           bytes_accessed=bytes_accessed)

    dx_t = pl.pallas_call(
        _cts_step_kernel,
        out_shape=jax.ShapeDtypeStruct((n_x, B), x.dtype),
        grid_spec=pltpu.PrefetchScalarGridSpec(
            num_scalar_prefetch=0,
            grid=grid,
            in_specs=[
                pl.BlockSpec((n_x, tm), lambda i: (0, i)),       # x^T
                pl.BlockSpec((n_u, tm), lambda i: (0, i)),       # u^T
                pl.BlockSpec((hidden, n_x), lambda i: (0, 0)),   # W1x
                pl.BlockSpec((hidden, n_u), lambda i: (0, 0)),   # W1u
                pl.BlockSpec((hidden, 1), lambda i: (0, 0)),     # b1
                pl.BlockSpec((n_x, hidden), lambda i: (0, 0)),   # W2
                pl.BlockSpec((n_x, 1), lambda i: (0, 0)),        # b2
            ],
            out_specs=pl.BlockSpec((n_x, tm), lambda i: (0, i)),  # dx^T
        ),
        compiler_params=pltpu.CompilerParams(
            dimension_semantics=("parallel",),
            vmem_limit_bytes=vmem_limit_bytes,
        ),
        cost_estimate=cost,
    )(x_t, u_t, w1x, w1u, b1_col, w2, b2_col)

    return dx_t.T                  # (B, n_x)


if __name__ == "__main__":
    # Cascaded two-tank system: 2 states, 1 input, hidden_size=64.
    B, n_x, n_u, hidden = 8, 2, 1, 64

    key = jax.random.PRNGKey(0)
    kx, ku, kw1, kb1, kw2, kb2 = jax.random.split(key, 6)

    x = jax.random.normal(kx, (B, n_x), dtype=jnp.float32)
    u = jax.random.normal(ku, (B, n_u), dtype=jnp.float32)

    # nn.Linear default init (init_small=True is just a different parameter
    # setting of the same kernel; default init gives a non-trivial check).
    bound1 = 1.0 / jnp.sqrt(jnp.float32(n_x + n_u))
    w1 = jax.random.uniform(kw1, (hidden, n_x + n_u), jnp.float32, -bound1, bound1)
    b1 = jax.random.uniform(kb1, (hidden,), jnp.float32, -bound1, bound1)
    bound2 = 1.0 / jnp.sqrt(jnp.float32(hidden))
    w2 = jax.random.uniform(kw2, (n_x, hidden), jnp.float32, -bound2, bound2)
    b2 = jax.random.uniform(kb2, (n_x,), jnp.float32, -bound2, bound2)

    dx = cts_neural_state_space(x, u, w1, b1, w2, b2)
    jax.block_until_ready(dx)

    # Pure-JAX reference: relu(cat(x, u) @ W1.T + b1) @ W2.T + b2
    xu = jnp.concatenate([x, u], axis=-1)
    dx_expected = jnp.maximum(xu @ w1.T + b1, 0.0) @ w2.T + b2

    assert dx.shape == (B, n_x)
    assert jnp.allclose(dx, dx_expected, atol=1e-5, rtol=1e-5)

    print("KERNEL_OK")
</pallas_src>

<mosaic_0001>
module attributes {stable_mosaic.version = 11 : i64} {
  func.func @_cts_step_kernel(%arg0: i32, %arg1: memref<2x8xf32, #tpu.memory_space<vmem>>, %arg2: memref<1x8xf32, #tpu.memory_space<vmem>>, %arg3: memref<64x2xf32, #tpu.memory_space<vmem>>, %arg4: memref<64x1xf32, #tpu.memory_space<vmem>>, %arg5: memref<64x1xf32, #tpu.memory_space<vmem>>, %arg6: memref<2x64xf32, #tpu.memory_space<vmem>>, %arg7: memref<2x1xf32, #tpu.memory_space<vmem>>, %arg8: memref<2x8xf32, #tpu.memory_space<vmem>>) attributes {dimension_semantics = [#tpu.dimension_semantics<parallel>], iteration_bounds = array<i64: 1>, scalar_prefetch = 0 : i64, scratch_operands = 0 : i64, tpu.core_type = #tpu.core_type<tc>, window_params = [{transform_indices = @transform_0, window_bounds = array<i64: 2, 8>}, {transform_indices = @transform_1, window_bounds = array<i64: 1, 8>}, {pipeline_mode = #tpu.pipeline_mode<synchronous>, transform_indices = @transform_2, window_bounds = array<i64: 64, 2>}, {pipeline_mode = #tpu.pipeline_mode<synchronous>, transform_indices = @transform_3, window_bounds = array<i64: 64, 1>}, {pipeline_mode = #tpu.pipeline_mode<synchronous>, transform_indices = @transform_4, window_bounds = array<i64: 64, 1>}, {pipeline_mode = #tpu.pipeline_mode<synchronous>, transform_indices = @transform_5, window_bounds = array<i64: 2, 64>}, {pipeline_mode = #tpu.pipeline_mode<synchronous>, transform_indices = @transform_6, window_bounds = array<i64: 2, 1>}, {transform_indices = @transform_7, window_bounds = array<i64: 2, 8>}]} {
    %c0 = arith.constant 0 : index
    %c0_0 = arith.constant 0 : index
    %0 = vector.load %arg1[%c0, %c0_0] : memref<2x8xf32, #tpu.memory_space<vmem>>, vector<2x8xf32>
    %c0_1 = arith.constant 0 : index
    %c0_2 = arith.constant 0 : index
    %1 = vector.load %arg2[%c0_1, %c0_2] : memref<1x8xf32, #tpu.memory_space<vmem>>, vector<1x8xf32>
    %c0_3 = arith.constant 0 : index
    %c0_4 = arith.constant 0 : index
    %2 = vector.load %arg3[%c0_3, %c0_4] : memref<64x2xf32, #tpu.memory_space<vmem>>, vector<64x2xf32>
    %c0_5 = arith.constant 0 : index
    %c0_6 = arith.constant 0 : index
    %3 = vector.load %arg4[%c0_5, %c0_6] : memref<64x1xf32, #tpu.memory_space<vmem>>, vector<64x1xf32>
    %c0_7 = arith.constant 0 : index
    %c0_8 = arith.constant 0 : index
    %4 = vector.load %arg5[%c0_7, %c0_8] : memref<64x1xf32, #tpu.memory_space<vmem>>, vector<64x1xf32>
    %5 = vector.extract_strided_slice %2 {offsets = [0, 0], sizes = [64, 1], strides = [1, 1]} : vector<64x2xf32> to vector<64x1xf32>
    %6 = vector.extract_strided_slice %0 {offsets = [0, 0], sizes = [1, 8], strides = [1, 1]} : vector<2x8xf32> to vector<1x8xf32>
    %7 = vector.broadcast %5 : vector<64x1xf32> to vector<64x8xf32>
    %8 = vector.broadcast %6 : vector<1x8xf32> to vector<64x8xf32>
    %9 = arith.mulf %7, %8 : vector<64x8xf32>
    %10 = vector.broadcast %4 : vector<64x1xf32> to vector<64x8xf32>
    %11 = arith.addf %10, %9 : vector<64x8xf32>
    %12 = vector.extract_strided_slice %2 {offsets = [0, 1], sizes = [64, 1], strides = [1, 1]} : vector<64x2xf32> to vector<64x1xf32>
    %13 = vector.extract_strided_slice %0 {offsets = [1, 0], sizes = [1, 8], strides = [1, 1]} : vector<2x8xf32> to vector<1x8xf32>
    %14 = vector.broadcast %12 : vector<64x1xf32> to vector<64x8xf32>
    %15 = vector.broadcast %13 : vector<1x8xf32> to vector<64x8xf32>
    %16 = arith.mulf %14, %15 : vector<64x8xf32>
    %17 = arith.addf %11, %16 : vector<64x8xf32>
    %18 = vector.broadcast %3 : vector<64x1xf32> to vector<64x8xf32>
    %19 = vector.broadcast %1 : vector<1x8xf32> to vector<64x8xf32>
    %20 = arith.mulf %18, %19 : vector<64x8xf32>
    %21 = arith.addf %17, %20 : vector<64x8xf32>
    %cst = arith.constant 0.000000e+00 : f32
    %22 = vector.broadcast %cst : f32 to vector<64x8xf32>
    %23 = arith.maximumf %21, %22 : vector<64x8xf32>
    %c0_9 = arith.constant 0 : index
    %c0_10 = arith.constant 0 : index
    %24 = vector.load %arg6[%c0_9, %c0_10] : memref<2x64xf32, #tpu.memory_space<vmem>>, vector<2x64xf32>
    %cst_11 = arith.constant dense<0.000000e+00> : vector<2x8xf32>
    %25 = tpu.matmul %24, %23, %cst_11 {dimension_numbers = #tpu.dot_dimension_numbers<[1], [0], [0], [1], [0, 0, 1, 1], [], []>} : vector<2x64xf32>, vector<64x8xf32>, vector<2x8xf32> -> vector<2x8xf32>
    %c0_12 = arith.constant 0 : index
    %c0_13 = arith.constant 0 : index
    %26 = vector.load %arg7[%c0_12, %c0_13] : memref<2x1xf32, #tpu.memory_space<vmem>>, vector<2x1xf32>
    %27 = vector.broadcast %26 : vector<2x1xf32> to vector<2x8xf32>
    %28 = arith.addf %25, %27 : vector<2x8xf32>
    %c0_14 = arith.constant 0 : index
    %c0_15 = arith.constant 0 : index
    %29 = vector.load %arg8[%c0_14, %c0_15] : memref<2x8xf32, #tpu.memory_space<vmem>>, vector<2x8xf32>
    tpu.vector_store %arg8[%c0_14, %c0_15], %28 {strides = array<i32>} : memref<2x8xf32, #tpu.memory_space<vmem>>, vector<2x8xf32>,
    return
  }
  func.func @transform_0(%arg0: i32) -> (i32, i32) {
    %c0_i32 = arith.constant 0 : i32
    %c0_i32_0 = arith.constant 0 : i32
    return %c0_i32, %arg0 : i32, i32
  }
  func.func @transform_1(%arg0: i32) -> (i32, i32) {
    %c0_i32 = arith.constant 0 : i32
    %c0_i32_0 = arith.constant 0 : i32
    return %c0_i32, %arg0 : i32, i32
  }
  func.func @transform_2(%arg0: i32) -> (i32, i32) {
    %c0_i32 = arith.constant 0 : i32
    %c0_i32_0 = arith.constant 0 : i32
    %c0_i32_1 = arith.constant 0 : i32
    return %c0_i32, %c0_i32_0 : i32, i32
  }
  func.func @transform_3(%arg0: i32) -> (i32, i32) {
    %c0_i32 = arith.constant 0 : i32
    %c0_i32_0 = arith.constant 0 : i32
    %c0_i32_1 = arith.constant 0 : i32
    return %c0_i32, %c0_i32_0 : i32, i32
  }
  func.func @transform_4(%arg0: i32) -> (i32, i32) {
    %c0_i32 = arith.constant 0 : i32
    %c0_i32_0 = arith.constant 0 : i32
    %c0_i32_1 = arith.constant 0 : i32
    return %c0_i32, %c0_i32_0 : i32, i32
  }
  func.func @transform_5(%arg0: i32) -> (i32, i32) {
    %c0_i32 = arith.constant 0 : i32
    %c0_i32_0 = arith.constant 0 : i32
    %c0_i32_1 = arith.constant 0 : i32
    return %c0_i32, %c0_i32_0 : i32, i32
  }
  func.func @transform_6(%arg0: i32) -> (i32, i32) {
    %c0_i32 = arith.constant 0 : i32
    %c0_i32_0 = arith.constant 0 : i32
    %c0_i32_1 = arith.constant 0 : i32
    return %c0_i32, %c0_i32_0 : i32, i32
  }
  func.func @transform_7(%arg0: i32) -> (i32, i32) {
    %c0_i32 = arith.constant 0 : i32
    %c0_i32_0 = arith.constant 0 : i32
    return %c0_i32, %arg0 : i32, i32
  }
}

</mosaic_0001>

<llo_original>
// kernel: tpu_custom_call.1
$region0: #{tpu_custom_call.1}
  #allocation0 [shape = 'u32[]', space=smem, size = 0x4, offset = 0x4, fixed_abs, tag = 'smem constant byte address 0x4 - core index']
  #allocation1 [shape = 'u32[144,128]{1,0:T(1,128)}', space=vmem, size = 0x12000, scoped, tag = 'internal scratch']
  %s0 = inlined_call_operand.vmem [shape: f32[2,8], index: 0, kind: input, shape index: {}]
  %s1 = inlined_call_operand.vmem [shape: f32[1,8], index: 1, kind: input, shape index: {}]
  %s2 = inlined_call_operand.vmem [shape: f32[64,2], index: 2, kind: input, shape index: {}]
  %s3 = inlined_call_operand.vmem [shape: f32[64,1], index: 3, kind: input, shape index: {}]
  %s4 = inlined_call_operand.vmem [shape: f32[64,1], index: 4, kind: input, shape index: {}]
  %s5 = inlined_call_operand.vmem [shape: f32[2,64], index: 5, kind: input, shape index: {}]
  %s6 = inlined_call_operand.vmem [shape: f32[2,1], index: 6, kind: input, shape index: {}]
  %s7 = inlined_call_operand.hbm [shape: f32[2,8], index: 7, kind: output, shape index: {}]
  %s8 = sld [smem:[#allocation0]]
  $region38: #{tpu_custom_call.1} parent=0
    _
  %s10 = ssub.s32 1, %s8
  %s11 = scalar_select 0, %s10, %s8
  $region1: #{tpu_custom_call.1} parent=0
    #allocation2 [shape = 'u8[1024]{0}', space=vmem, size = 0x400, scoped, tag = 'output window, operand 0, single buffered']
    #allocation3 [shape = 's32[1]{0}', space=sflag, size = 0x4, scoped, tag = 'scoped memory for tpu_custom_call.1']
    %12 = vsyncpa [#allocation3], 0
    // Predicated region
    $region2: #{tpu_custom_call.1} parent=1 // pred_check
      _
    $region3: #{tpu_custom_call.1} parent=1 // pred_check_branch
      %14 = sbr.rel (0) target = $region5
    $region4: #{tpu_custom_call.1} parent=1 // pred_region
      _
    $region5: #{tpu_custom_call.1} parent=1 // pred_fallthru
      _
    // Predicated region
    $region6: #{tpu_custom_call.1} parent=1 // pred_check
      _
    $region7: #{tpu_custom_call.1} parent=1 // pred_check_branch
      %16 = sbr.rel (0) target = $region9
    $region8: #{tpu_custom_call.1} parent=1 // pred_region
      _
    $region9: #{tpu_custom_call.1} parent=1 // pred_fallthru
      _
    // Predicated region
    $region10: #{tpu_custom_call.1} parent=1 // pred_check
      _
    $region11: #{tpu_custom_call.1} parent=1 // pred_check_branch
      %18 = sbr.rel (0) target = $region13
    $region12: #{tpu_custom_call.1} parent=1 // pred_region
      _
    $region13: #{tpu_custom_call.1} parent=1 // pred_fallthru
      _
    // Predicated region
    $region14: #{tpu_custom_call.1} parent=1 // pred_check
      _
    $region15: #{tpu_custom_call.1} parent=1 // pred_check_branch
      %20 = sbr.rel (0) target = $region17
    $region16: #{tpu_custom_call.1} parent=1 // pred_region
      _
    $region17: #{tpu_custom_call.1} parent=1 // pred_fallthru
      _
    // Predicated region
    $region18: #{tpu_custom_call.1} parent=1 // pred_check
      _
    $region19: #{tpu_custom_call.1} parent=1 // pred_check_branch
      %22 = sbr.rel (0) target = $region21
    $region20: #{tpu_custom_call.1} parent=1 // pred_region
      _
    $region21: #{tpu_custom_call.1} parent=1 // pred_fallthru
      _
    // Predicated region
    $region22: #{tpu_custom_call.1} parent=1 // pred_check
      _
    $region23: #{tpu_custom_call.1} parent=1 // pred_check_branch
      %24 = sbr.rel (0) target = $region25
    $region24: #{tpu_custom_call.1} parent=1 // pred_region
      _
    $region25: #{tpu_custom_call.1} parent=1 // pred_fallthru
      _
    // Predicated region
    $region26: #{tpu_custom_call.1} parent=1 // pred_check
      _
    $region27: #{tpu_custom_call.1} parent=1 // pred_check_branch
      %26 = sbr.rel (0) target = $region29
    $region28: #{tpu_custom_call.1} parent=1 // pred_region
      _
    $region29: #{tpu_custom_call.1} parent=1 // pred_fallthru
      _
    %v27 = vld [vmem:[%s0] sm:$0x3]
    %v28 = vld [vmem:[%s1] sm:$0x1]
    %v29 = vld [vmem:[%s2] sm:$0xff]
    %v30 = vld [vmem:[%s2 + $0x8] sm:$0xff]
    %v31 = vld [vmem:[%s2 + $0x10] sm:$0xff]
    %v32 = vld [vmem:[%s2 + $0x18] sm:$0xff]
    %v33 = vld [vmem:[%s2 + $0x20] sm:$0xff]
    %v34 = vld [vmem:[%s2 + $0x28] sm:$0xff]
    %v35 = vld [vmem:[%s2 + $0x30] sm:$0xff]
    %v36 = vld [vmem:[%s2 + $0x38] sm:$0xff]
    %v37 = vld [vmem:[%s3] sm:$0xff]
    %v38 = vld [vmem:[%s3 + $0x8] sm:$0xff]
    %v39 = vld [vmem:[%s3 + $0x10] sm:$0xff]
    %v40 = vld [vmem:[%s3 + $0x18] sm:$0xff]
    %v41 = vld [vmem:[%s3 + $0x20] sm:$0xff]
    %v42 = vld [vmem:[%s3 + $0x28] sm:$0xff]
    %v43 = vld [vmem:[%s3 + $0x30] sm:$0xff]
    %v44 = vld [vmem:[%s3 + $0x38] sm:$0xff]
    %v45 = vld [vmem:[%s4] sm:$0xff]
    %v46 = vld [vmem:[%s4 + $0x8] sm:$0xff]
    %v47 = vld [vmem:[%s4 + $0x10] sm:$0xff]
    %v48 = vld [vmem:[%s4 + $0x18] sm:$0xff]
    %v49 = vld [vmem:[%s4 + $0x20] sm:$0xff]
    %v50 = vld [vmem:[%s4 + $0x28] sm:$0xff]
    %v51 = vld [vmem:[%s4 + $0x30] sm:$0xff]
    %v52 = vld [vmem:[%s4 + $0x38] sm:$0xff]
    %54 = vset.pattern.permute.xlu0 0
    %55 = vperm.xlu0 %54, %v29
    %v56 = vpop.permute.xlu0 %55
    %59 = vset.pattern.permute.xlu0 0
    %60 = vperm.xlu0 %59, %v30
    %v61 = vpop.permute.xlu0 %60
    %64 = vset.pattern.permute.xlu0 0
    %65 = vperm.xlu0 %64, %v31
    %v66 = vpop.permute.xlu0 %65
    %69 = vset.pattern.permute.xlu0 0
    %70 = vperm.xlu0 %69, %v32
    %v71 = vpop.permute.xlu0 %70
    %74 = vset.pattern.permute.xlu0 0
    %75 = vperm.xlu0 %74, %v33
    %v76 = vpop.permute.xlu0 %75
    %79 = vset.pattern.permute.xlu0 0
    %80 = vperm.xlu0 %79, %v34
    %v81 = vpop.permute.xlu0 %80
    %84 = vset.pattern.permute.xlu0 0
    %85 = vperm.xlu0 %84, %v35
    %v86 = vpop.permute.xlu0 %85
    %89 = vset.pattern.permute.xlu0 0
    %90 = vperm.xlu0 %89, %v36
    %v91 = vpop.permute.xlu0 %90
    %v93 = vlaneseq
    %v94 = vshrl.u32 %v93, 7
    %v95 = vsub.s32 0, %v94
    %v96 = vrot.slane %v27, %v95
    %v97 = vmul.f32 %v56, %v96
    %v98 = vmul.f32 %v61, %v96
    %v99 = vmul.f32 %v66, %v96
    %v100 = vmul.f32 %v71, %v96
    %v101 = vmul.f32 %v76, %v96
    %v102 = vmul.f32 %v81, %v96
    %v103 = vmul.f32 %v86, %v96
    %v104 = vmul.f32 %v91, %v96
    %106 = vset.pattern.permute.xlu0 0
    %107 = vperm.xlu0 %106, %v45
    %v108 = vpop.permute.xlu0 %107
    %111 = vset.pattern.permute.xlu0 0
    %112 = vperm.xlu0 %111, %v46
    %v113 = vpop.permute.xlu0 %112
    %116 = vset.pattern.permute.xlu0 0
    %117 = vperm.xlu0 %116, %v47
    %v118 = vpop.permute.xlu0 %117
    %121 = vset.pattern.permute.xlu0 0
    %122 = vperm.xlu0 %121, %v48
    %v123 = vpop.permute.xlu0 %122
    %126 = vset.pattern.permute.xlu0 0
    %127 = vperm.xlu0 %126, %v49
    %v128 = vpop.permute.xlu0 %127
    %131 = vset.pattern.permute.xlu0 0
    %132 = vperm.xlu0 %131, %v50
    %v133 = vpop.permute.xlu0 %132
    %136 = vset.pattern.permute.xlu0 0
    %137 = vperm.xlu0 %136, %v51
    %v138 = vpop.permute.xlu0 %137
    %141 = vset.pattern.permute.xlu0 0
    %142 = vperm.xlu0 %141, %v52
    %v143 = vpop.permute.xlu0 %142
    %v145 = vadd.f32 %v108, %v97
    %v146 = vadd.f32 %v113, %v98
    %v147 = vadd.f32 %v118, %v99
    %v148 = vadd.f32 %v123, %v100
    %v149 = vadd.f32 %v128, %v101
    %v150 = vadd.f32 %v133, %v102
    %v151 = vadd.f32 %v138, %v103
    %v152 = vadd.f32 %v143, %v104
    %153 = vset.pattern.permute.xlu0 1
    %154 = vperm.xlu0 %153, %v29
    %v155 = vpop.permute.xlu0 %154
    %157 = vset.pattern.permute.xlu0 1
    %158 = vperm.xlu0 %157, %v30
    %v159 = vpop.permute.xlu0 %158
    %161 = vset.pattern.permute.xlu0 1
    %162 = vperm.xlu0 %161, %v31
    %v163 = vpop.permute.xlu0 %162
    %165 = vset.pattern.permute.xlu0 1
    %166 = vperm.xlu0 %165, %v32
    %v167 = vpop.permute.xlu0 %166
    %169 = vset.pattern.permute.xlu0 1
    %170 = vperm.xlu0 %169, %v33
    %v171 = vpop.permute.xlu0 %170
    %173 = vset.pattern.permute.xlu0 1
    %174 = vperm.xlu0 %173, %v34
    %v175 = vpop.permute.xlu0 %174
    %177 = vset.pattern.permute.xlu0 1
    %178 = vperm.xlu0 %177, %v35
    %v179 = vpop.permute.xlu0 %178
    %181 = vset.pattern.permute.xlu0 1
    %182 = vperm.xlu0 %181, %v36
    %v183 = vpop.permute.xlu0 %182
    %v185 = vlaneseq
    %v186 = vshrl.u32 %v185, 7
    %v187 = vsub.s32 1, %v186
    %v188 = vrot.slane %v27, %v187
    %v189 = vmul.f32 %v155, %v188
    %v190 = vmul.f32 %v159, %v188
    %v191 = vmul.f32 %v163, %v188
    %v192 = vmul.f32 %v167, %v188
    %v193 = vmul.f32 %v171, %v188
    %v194 = vmul.f32 %v175, %v188
    %v195 = vmul.f32 %v179, %v188
    %v196 = vmul.f32 %v183, %v188
    %v197 = vadd.f32 %v145, %v189
    %v198 = vadd.f32 %v146, %v190
    %v199 = vadd.f32 %v147, %v191
    %v200 = vadd.f32 %v148, %v192
    %v201 = vadd.f32 %v149, %v193
    %v202 = vadd.f32 %v150, %v194
    %v203 = vadd.f32 %v151, %v195
    %v204 = vadd.f32 %v152, %v196
    %206 = vset.pattern.permute.xlu0 0
    %207 = vperm.xlu0 %206, %v37
    %v208 = vpop.permute.xlu0 %207
    %211 = vset.pattern.permute.xlu0 0
    %212 = vperm.xlu0 %211, %v38
    %v213 = vpop.permute.xlu0 %212
    %216 = vset.pattern.permute.xlu0 0
    %217 = vperm.xlu0 %216, %v39
    %v218 = vpop.permute.xlu0 %217
    %221 = vset.pattern.permute.xlu0 0
    %222 = vperm.xlu0 %221, %v40
    %v223 = vpop.permute.xlu0 %222
    %226 = vset.pattern.permute.xlu0 0
    %227 = vperm.xlu0 %226, %v41
    %v228 = vpop.permute.xlu0 %227
    %231 = vset.pattern.permute.xlu0 0
    %232 = vperm.xlu0 %231, %v42
    %v233 = vpop.permute.xlu0 %232
    %236 = vset.pattern.permute.xlu0 0
    %237 = vperm.xlu0 %236, %v43
    %v238 = vpop.permute.xlu0 %237
    %241 = vset.pattern.permute.xlu0 0
    %242 = vperm.xlu0 %241, %v44
    %v243 = vpop.permute.xlu0 %242
    %v246 = vlaneseq
    %v247 = vshrl.u32 %v246, 7
    %v248 = vsub.s32 0, %v247
    %v249 = vrot.slane %v28, %v248
    %v251 = vmul.f32 %v208, %v249
    %v252 = vmul.f32 %v213, %v249
    %v253 = vmul.f32 %v218, %v249
    %v254 = vmul.f32 %v223, %v249
    %v255 = vmul.f32 %v228, %v249
    %v256 = vmul.f32 %v233, %v249
    %v257 = vmul.f32 %v238, %v249
    %v258 = vmul.f32 %v243, %v249
    %v259 = vadd.f32 %v197, %v251
    %v260 = vadd.f32 %v198, %v252
    %v261 = vadd.f32 %v199, %v253
    %v262 = vadd.f32 %v200, %v254
    %v263 = vadd.f32 %v201, %v255
    %v264 = vadd.f32 %v202, %v256
    %v265 = vadd.f32 %v203, %v257
    %v266 = vadd.f32 %v204, %v258
    %v267 = vmax.f32 %v259, 0.0
    %v268 = vmax.f32 %v260, 0.0
    %v269 = vmax.f32 %v261, 0.0
    %v270 = vmax.f32 %v262, 0.0
    %v271 = vmax.f32 %v263, 0.0
    %v272 = vmax.f32 %v264, 0.0
    %v273 = vmax.f32 %v265, 0.0
    %v274 = vmax.f32 %v266, 0.0
    %v275 = vld [vmem:[%s5] sm:$0x3]
    %v276 = vld [vmem:[%s6] sm:$0x3]
    %278 = vset.pattern.permute.xlu0 0
    %279 = vperm.xlu0 %278, %v276
    %v280 = vpop.permute.xlu0 %279
    %vm282 = vcmask 523264
    %v284 = vsel %vm282, %v275, 0
    %286 = vmatprep.subr.mxu0 0.0
    %287 = vmatpush1.msra.mxu0 0.0
    %288 = vmatprep.subr.mxu0 0.0
    %289 = vmatpush1.msra.mxu0 0.0
    %290 = vmatprep.subr.mxu0 0.0
    %291 = vmatpush1.msra.mxu0 0.0
    %292 = vmatprep.subr.mxu0 0.0
    %293 = vmatpush1.msra.mxu0 0.0
    %294 = vmatprep.subr.mxu0 0.0
    %295 = vmatpush1.msra.mxu0 0.0
    %296 = vmatprep.subr.mxu0 0.0
    %297 = vmatpush1.msra.mxu0 0.0
    %298 = vmatprep.subr.mxu0 0.0
    %299 = vmatpush1.msra.mxu0 0.0
    %300 = vmatprep.subr.mxu0 0.0
    %301 = vmatpush1.msra.mxu0 0.0
    %302 = vmatprep.subr.mxu0 0.0
    %303 = vmatpush1.msra.mxu0 %v274
    %304 = vmatprep.subr.mxu0 0.0
    %305 = vmatpush1.msra.mxu0 %v273
    %306 = vmatprep.subr.mxu0 0.0
    %307 = vmatpush1.msra.mxu0 %v272
    %308 = vmatprep.subr.mxu0 0.0
    %309 = vmatpush1.msra.mxu0 %v271
    %310 = vmatprep.subr.mxu0 0.0
    %311 = vmatpush1.msra.mxu0 %v270
    %312 = vmatprep.subr.mxu0 0.0
    %313 = vmatpush1.msra.mxu0 %v269
    %314 = vmatprep.subr.mxu0 0.0
    %315 = vmatpush1.msra.mxu0 %v268
    %316 = vmatprep.subr.mxu0 0.0
    %317 = vmatpush1.msra.mxu0 %v267
    %318 = vmatprep.subr.mxu0 0.0
    %319 = vmatpush2.msra.mxu0 0.0
    %320 = vmatprep.subr.mxu0 0.0
    %321 = vmatpush2.msra.mxu0 0.0
    %322 = vmatprep.subr.mxu0 0.0
    %323 = vmatpush2.msra.mxu0 0.0
    %324 = vmatprep.subr.mxu0 0.0
    %325 = vmatpush2.msra.mxu0 0.0
    %326 = vmatprep.subr.mxu0 0.0
    %327 = vmatpush2.msra.mxu0 0.0
    %328 = vmatprep.subr.mxu0 0.0
    %329 = vmatpush2.msra.mxu0 0.0
    %330 = vmatprep.subr.mxu0 0.0
    %331 = vmatpush2.msra.mxu0 0.0
    %332 = vmatprep.subr.mxu0 0.0
    %333 = vmatpush2.msra.mxu0 0.0
    %334 = vmatprep.subr.mxu0 0.0
    %335 = vmatpush2.msra.mxu0 0.0
    %336 = vmatprep.subr.mxu0 0.0
    %337 = vmatpush2.msra.mxu0 0.0
    %338 = vmatprep.subr.mxu0 0.0
    %339 = vmatpush2.msra.mxu0 0.0
    %340 = vmatprep.subr.mxu0 0.0
    %341 = vmatpush2.msra.mxu0 0.0
    %342 = vmatprep.subr.mxu0 0.0
    %343 = vmatpush2.msra.mxu0 0.0
    %344 = vmatprep.subr.mxu0 0.0
    %345 = vmatpush2.msra.mxu0 0.0
    %346 = vmatprep.subr.mxu0 0.0
    %347 = vmatpush2.msra.mxu0 0.0
    %348 = vmatprep.subr.mxu0 0.0
    %349 = vmatpush2.msra.mxu0 0.0
    %350 = vmatprep.mubr.f32.mxu0 0.0
    %351 = vmatmul.mubr.f32.gmra.mxu0 %v284
    %v352 = vpop.f32.mrf.mxu0
    %v353 = vadd.f32 %v280, %v352
    %v354 = vpop.f32.mrf.mxu0
    %355 = vdwg.mxu0
    %vm356 = vcmask 58368
    %357 = vst.msk [vmem:[#allocation2] sm:$0x3] %vm356, %v353
    // Predicated region
    $region30: #{tpu_custom_call.1} parent=1 // pred_check
      _
    $region31: #{tpu_custom_call.1} parent=1 // pred_check_branch
      %359 = sbr.rel (0) target = $region33
    $region32: #{tpu_custom_call.1} parent=1 // pred_region
      %s361 = ssub.s32 32, 32
      %362 = vsyncadd [#allocation3], %s361
      %s364 = sshll.u32 [#allocation2], 4
      %s365 = int_to_ptr.vmem [resolvable:$true] %s364
      %367 = dma.vmem_to_hbm [thread:$0]  %s365, 32, %s7, [#allocation3]
    $region33: #{tpu_custom_call.1} parent=1 // pred_fallthru
      _
    // Predicated region
    $region34: #{tpu_custom_call.1} parent=1 // pred_check
      _
    $region35: #{tpu_custom_call.1} parent=1 // pred_check_branch
      %369 = sbr.rel (0) target = $region37
    $region36: #{tpu_custom_call.1} parent=1 // pred_region
      %370 = dma.done [#allocation3], 32
    $region37: #{tpu_custom_call.1} parent=1 // pred_fallthru
      _
    %371 = vsyncpa [#allocation3], 1

</llo_original>
